<compile_context>
chip_gen: v6e
topology: v6e:2x2x1
jax: 0.10.0
libtpu: 0.0.40
codegen_flags: <defaults>
</compile_context>

<pallas_src>
import jax
import jax.numpy as jnp
from jax.experimental import pallas as pl
from jax.experimental.pallas import tpu as pltpu


# Lane-dim tile: max(R, 8) * _TC_MAX * 4 B = 2 MiB per VMEM buffer.
_TC_MAX = 65536


def linear_kernel(wb_ref, x_ref, o_ref):
    """y = x * w + b on one lane-dense (R, TC) tile.

    wb_ref: (2,) f32 in SMEM -> wb_ref[0] = w, wb_ref[1] = b.
    x_ref / o_ref: (R, TC) f32 VMEM tiles (R <= 8, TC lane-dense).
    """
    w = wb_ref[0]
    b = wb_ref[1]
    o_ref[...] = x_ref[...] * w + b  # broadcasted VPU FMA == x @ W^T + b


def _sublane_rows(n):
    """Largest r in {8, 4, 2, 1} dividing n (free (n,) -> (r, n//r) reshape)."""
    for r in (8, 4, 2):
        if n % r == 0:
            return r
    return 1


@jax.jit
def linear_forward(x, weight, bias):
    """x: (N, 1) f32, weight: (1, 1) f32, bias: (1,) f32 -> (N, 1) f32."""
    n, in_f = x.shape
    assert in_f == 1 and weight.shape == (1, 1) and bias.shape == (1,)
    dtype = x.dtype

    # Params as a single tiny (2,) SMEM operand (32-bit words; stays f32).
    wb = jnp.concatenate([weight.reshape(1), bias.reshape(1)]).astype(dtype)

    # Free, copy-less lane-dense view: (N, 1) -> (R, N/R), row-major contiguous.
    r = _sublane_rows(n)
    cols = n // r
    x2d = x.reshape(r, cols)

    # Lane tiling.  If everything fits in one 2 MiB tile, take the full lane
    # extent (block dim == full array dim is always legal, even if not a
    # multiple of 128); otherwise use 128-aligned _TC_MAX tiles with a clipped
    # partial edge block -- no padded HBM bytes are moved either way.
    if cols <= _TC_MAX:
        tc = cols
    else:
        tc = _TC_MAX
    grid = (pl.cdiv(cols, tc),)
    # TODO(synk): on v7x, mid-sized N can give a small/odd step count and an
    # imbalanced 2-TC split; shrinking tc to get >=8 even steps is a further
    # refinement left out for simplicity.

    out2d = pl.pallas_call(
        linear_kernel,
        out_shape=jax.ShapeDtypeStruct((r, cols), dtype),
        grid_spec=pltpu.PrefetchScalarGridSpec(
            num_scalar_prefetch=0,
            grid=grid,
            in_specs=[
                # (2,) params live untiled in SMEM, staged once and reused.
                pl.BlockSpec(memory_space=pltpu.MemorySpace.SMEM),
                # Lane-dense tiles, auto double-buffered by BlockSpec.
                pl.BlockSpec((r, tc), lambda j: (0, j)),
            ],
            out_specs=pl.BlockSpec((r, tc), lambda j: (0, j)),
        ),
        compiler_params=pltpu.CompilerParams(
            dimension_semantics=("parallel",),  # shards steps across v7x TCs
        ),
        cost_estimate=pl.CostEstimate(
            flops=2 * n,          # one mul + one add per element
            transcendentals=0,
            bytes_accessed=2 * n * dtype.itemsize + 2 * dtype.itemsize,
        ),
    )(wb, x2d)

    # Free reshape back to the module's (N, 1) output layout.
    return out2d.reshape(n, 1)


if __name__ == "__main__":
    key = jax.random.PRNGKey(0)
    kx, kw, kb = jax.random.split(key, 3)

    # Deterministic parameter init (synthetic; mimics Linear(1,1) param shapes).
    weight = jax.random.normal(kw, (1, 1), dtype=jnp.float32) * 0.5  # (out, in)
    bias = jax.random.normal(kb, (1,), dtype=jnp.float32) * 0.5      # (out,)

    # Small batch consistent with the module: N=8 (single tiny tile).
    N = 8
    x = jax.random.normal(kx, (N, 1), dtype=jnp.float32)
    y = jax.block_until_ready(linear_forward(x, weight, bias))
    y_ref = x @ weight.T + bias
    assert y.shape == (N, 1)
    assert jnp.allclose(y, y_ref, atol=1e-6, rtol=1e-6)

    # Larger batch: copy-free lane-dense (8, 37500) view, no padding anywhere.
    N2 = 300_000
    x2 = jax.random.normal(kx, (N2, 1), dtype=jnp.float32)
    y2 = jax.block_until_ready(linear_forward(x2, weight, bias))
    y2_ref = x2 @ weight.T + bias
    assert y2.shape == (N2, 1)
    assert jnp.allclose(y2, y2_ref, atol=1e-6, rtol=1e-6)

    # Odd batch: exercises the r<8 fallback and the clipped partial edge block
    # (cols = 131075 > 65536 -> 3 grid steps, last one ragged).
    N3 = 131_075
    x3 = jax.random.normal(kx, (N3, 1), dtype=jnp.float32)
    y3 = jax.block_until_ready(linear_forward(x3, weight, bias))
    y3_ref = x3 @ weight.T + bias
    assert y3.shape == (N3, 1)
    assert jnp.allclose(y3, y3_ref, atol=1e-6, rtol=1e-6)

    print("KERNEL_OK")
</pallas_src>

<mosaic_0001>
module attributes {stable_mosaic.version = 11 : i64} {
  func.func @linear_kernel(%arg0: i32, %arg1: memref<2xf32, #tpu.memory_space<smem>>, %arg2: memref<8x1xf32, #tpu.memory_space<vmem>>, %arg3: memref<8x1xf32, #tpu.memory_space<vmem>>) attributes {dimension_semantics = [#tpu.dimension_semantics<parallel>], iteration_bounds = array<i64: 1>, scalar_prefetch = 0 : i64, scratch_operands = 0 : i64, tpu.core_type = #tpu.core_type<tc>, window_params = [{transform_indices = @transform_0, window_bounds = array<i64: 2>}, {transform_indices = @transform_1, window_bounds = array<i64: 8, 1>}, {transform_indices = @transform_2, window_bounds = array<i64: 8, 1>}]} {
    %c0 = arith.constant 0 : index
    %0 = memref.load %arg1[%c0] : memref<2xf32, #tpu.memory_space<smem>>
    %c1 = arith.constant 1 : index
    %1 = memref.load %arg1[%c1] : memref<2xf32, #tpu.memory_space<smem>>
    %c0_0 = arith.constant 0 : index
    %c0_1 = arith.constant 0 : index
    %2 = vector.load %arg2[%c0_0, %c0_1] : memref<8x1xf32, #tpu.memory_space<vmem>>, vector<8x1xf32>
    %3 = vector.broadcast %0 : f32 to vector<8x1xf32>
    %4 = arith.mulf %2, %3 : vector<8x1xf32>
    %5 = vector.broadcast %1 : f32 to vector<8x1xf32>
    %6 = arith.addf %4, %5 : vector<8x1xf32>
    %c0_2 = arith.constant 0 : index
    %c0_3 = arith.constant 0 : index
    %7 = vector.load %arg3[%c0_2, %c0_3] : memref<8x1xf32, #tpu.memory_space<vmem>>, vector<8x1xf32>
    tpu.vector_store %arg3[%c0_2, %c0_3], %6 {strides = array<i32>} : memref<8x1xf32, #tpu.memory_space<vmem>>, vector<8x1xf32>,
    return
  }
  func.func @transform_0(%arg0: i32) -> i32 {
    %c0_i32 = arith.constant 0 : i32
    %c0_i32_0 = arith.constant 0 : i32
    return %c0_i32 : i32
  }
  func.func @transform_1(%arg0: i32) -> (i32, i32) {
    %c0_i32 = arith.constant 0 : i32
    %c0_i32_0 = arith.constant 0 : i32
    return %c0_i32, %arg0 : i32, i32
  }
  func.func @transform_2(%arg0: i32) -> (i32, i32) {
    %c0_i32 = arith.constant 0 : i32
    %c0_i32_0 = arith.constant 0 : i32
    return %c0_i32, %arg0 : i32, i32
  }
}

</mosaic_0001>

<llo_original>
// kernel: linear_forward.1
$region0: #{linear_forward.1}
  #allocation0 [shape = 'u32[]', space=smem, size = 0x4, offset = 0x4, fixed_abs, tag = 'smem constant byte address 0x4 - core index']
  #allocation1 [shape = 'u32[144,128]{1,0:T(1,128)}', space=vmem, size = 0x12000, scoped, tag = 'internal scratch']
  %s0 = inlined_call_operand.vmem [shape: f32[2], index: 0, kind: input, shape index: {}]
  %s1 = inlined_call_operand.vmem [shape: f32[8,1], index: 1, kind: input, shape index: {}]
  %s2 = inlined_call_operand.vmem [shape: f32[8,1], index: 2, kind: output, shape index: {}]
  %s3 = sld [smem:[#allocation0]]
  $region22: #{linear_forward.1} parent=0
    _
  %s5 = ssub.s32 1, %s3
  %s6 = scalar_select 0, %s5, %s3
  $region1: #{linear_forward.1} parent=0
    #allocation2 [shape = 'u8[512]{0}', space=smem, size = 0x200, scoped, tag = 'input window, operand 0, single buffered']
    #allocation3 [shape = 's32[1]{0}', space=sflag, size = 0x4, scoped, tag = 'scoped memory for linear_forward.1']
    %7 = vsyncpa [#allocation3], 0
    // Predicated region
    $region2: #{linear_forward.1} parent=1 // pred_check
      _
    $region3: #{linear_forward.1} parent=1 // pred_check_branch
      %9 = sbr.rel (0) target = $region5
    $region4: #{linear_forward.1} parent=1 // pred_region
      %s11 = ssub.s32 16, 16
      %12 = vsyncadd [#allocation3], %s11
      %s14 = sshll.u32 %s0, 4
      %s15 = int_to_ptr.vmem [resolvable:$true] %s14
      %17 = dma.vmem_to_smem %s15, 16, [#allocation2], [#allocation3]
    $region5: #{linear_forward.1} parent=1 // pred_fallthru
      _
    // Predicated region
    $region6: #{linear_forward.1} parent=1 // pred_check
      _
    $region7: #{linear_forward.1} parent=1 // pred_check_branch
      %19 = sbr.rel (0) target = $region9
    $region8: #{linear_forward.1} parent=1 // pred_region
      _
    $region9: #{linear_forward.1} parent=1 // pred_fallthru
      _
    // Predicated region
    $region10: #{linear_forward.1} parent=1 // pred_check
      _
    $region11: #{linear_forward.1} parent=1 // pred_check_branch
      %21 = sbr.rel (0) target = $region13
    $region12: #{linear_forward.1} parent=1 // pred_region
      %22 = dma.done [#allocation3], 16
    $region13: #{linear_forward.1} parent=1 // pred_fallthru
      _
    %23 = sfence
    %s24 = sld [smem:[#allocation2]]
    %s25 = sld [smem:[#allocation2 + $0x1]]
    %v26 = vld [vmem:[%s1] sm:$0xff]
    %v27 = vstv %s24
    %v28 = vmul.f32 %v26, %v27
    %v29 = vstv %s25
    %v30 = vadd.f32 %v28, %v29
    %vm31 = vcmask 7168
    %32 = vst.msk [vmem:[%s2] sm:$0xff] %vm31, %v30
    // Predicated region
    $region14: #{linear_forward.1} parent=1 // pred_check
      _
    $region15: #{linear_forward.1} parent=1 // pred_check_branch
      %34 = sbr.rel (0) target = $region17
    $region16: #{linear_forward.1} parent=1 // pred_region
      _
    $region17: #{linear_forward.1} parent=1 // pred_fallthru
      _
    // Predicated region
    $region18: #{linear_forward.1} parent=1 // pred_check
      _
    $region19: #{linear_forward.1} parent=1 // pred_check_branch
      %36 = sbr.rel (0) target = $region21
    $region20: #{linear_forward.1} parent=1 // pred_region
      _
    $region21: #{linear_forward.1} parent=1 // pred_fallthru
      _
    %37 = vsyncpa [#allocation3], 1

</llo_original>
